<compile_context>
chip_gen: v7x
topology: tpu7x:2x2x1
jax: 0.10.0
libtpu: 0.0.40
codegen_flags: <defaults>
</compile_context>

<pallas_src>
from functools import lru_cache
from math import sqrt

import numpy as np
import jax
import jax.numpy as jnp
from jax.experimental import pallas as pl
from jax.experimental.pallas import tpu as pltpu


# --------------------------------------------------------------------------
# pltpu.roll rotation-convention probe (tiny one-off kernel, cached).
# We need shifted[i] = x[i + delta].  Depending on the convention:
#   roll(x, s)[i] == x[i - s]  (jnp.roll convention)  -> s = (-delta) % n
#   roll(x, s)[i] == x[i + s]                          -> s = (+delta) % n
# --------------------------------------------------------------------------
@lru_cache(maxsize=None)
def _roll_sign() -> int:
    def probe(x_ref, o_ref):
        o_ref[...] = pltpu.roll(x_ref[...], 1, axis=1)

    with jax.ensure_compile_time_eval():
        x = jax.lax.broadcasted_iota(jnp.float32, (8, 128), 1)
        out = pl.pallas_call(
            probe, out_shape=jax.ShapeDtypeStruct((8, 128), jnp.float32))(x)
        matches_jnp = bool(jnp.all(out == jnp.roll(x, 1, axis=1)))
    return -1 if matches_jnp else 1


# --------------------------------------------------------------------------
# Weight / constant preparation (runs in the XLA wrapper, tiny arrays)
# --------------------------------------------------------------------------
def _conv_tap_weights(w_oihw):
    """(Cout, Cin, K, K) -> (K*K, Cout, Cin): one matrix per spatial tap."""
    cout, cin, kh, kw = w_oihw.shape
    return jnp.transpose(w_oihw, (2, 3, 0, 1)).reshape(kh * kw, cout, cin)


def _deconv_phase_tap_weights(de_w_iohw, s):
    """ConvTranspose2d weight (Cin, Cout, 9, 9) -> (9, s*s*Cout, Cin).

    Output phase (fy, fx) of the transposed conv (stride s, pad 4, kernel 9,
    output_padding s-1) is a small conv over the low-res feature map:
        out[fy,fx][co, qy, qx] = sum_{ci,my,mx} h[ci, qy+1-my, qx+1-mx]
                                 * W[ci, co, fy + s*my, fx + s*mx]
    The source offsets qy+1-my are exactly the taps of a 3x3 / pad=1 stencil
    with dy = 2 - my, so we bake all 16 phases into 9 (48, 56) tap matrices
    (zero where fy + s*my falls outside the 9-tap kernel).
    """
    cin, cout, kh, kw = de_w_iohw.shape
    t = 3                                              # taps per dim (ceil(9/4))
    dy = np.arange(t)
    phase = np.arange(s)
    ky = phase[None, :] + s * (t - 1 - dy[:, None])    # (t, s)
    valid = (ky >= 0) & (ky < kh)
    kyc = np.clip(ky, 0, kh - 1)
    # gather -> (ci, co, dy, fy, dx, fx)
    g = de_w_iohw[:, :, kyc[:, :, None, None], kyc[None, None, :, :]]
    m = (valid[:, :, None, None] & valid[None, None, :, :]).astype(np.float32)
    g = g * jnp.asarray(m)[None, None]
    g = jnp.transpose(g, (2, 4, 3, 5, 1, 0))           # (dy, dx, fy, fx, co, ci)
    return g.reshape(t * t, s * s * cout, cin).astype(jnp.float32)


def _boundary_masks(H, W, max_off=2):
    """(2*max_off+1)^2 flat boundary masks, shape (k*k, 1, H*W) f32."""
    k = 2 * max_off + 1
    y, x = np.mgrid[0:H, 0:W]
    masks = np.zeros((k, k, H * W), np.float32)
    for oy in range(-max_off, max_off + 1):
        for ox in range(-max_off, max_off + 1):
            ok = ((y + oy >= 0) & (y + oy < H) & (x + ox >= 0) & (x + ox < W))
            masks[oy + max_off, ox + max_off] = ok.reshape(-1).astype(np.float32)
    return jnp.asarray(masks.reshape(k * k, 1, H * W))


# --------------------------------------------------------------------------
# Fused Pallas kernel: whole FSRCNN forward for one image per grid step
# --------------------------------------------------------------------------
def _make_fsrcnn_kernel(H, W, s):
    hw = H * W
    out_rows = s * s * 3
    roll_sign = _roll_sign()

    def kernel(x_ref, mask_ref,
               fe_w, fe_b, fe_a,
               sh_w, sh_b, sh_a,
               m0_w, m0_b, m0_a, m1_w, m1_b, m1_a,
               m2_w, m2_b, m2_a, m3_w, m3_b, m3_a,
               ex_w, ex_b, ex_a,
               de_w, de_b,
               o_ref):

        def shifted(a, dy, dx, pad):
            """a[(y+dy-pad)*W + (x+dx-pad)] with zeros outside the image."""
            oy, ox = dy - pad, dx - pad
            if oy == 0 and ox == 0:
                return a
            shift = (roll_sign * (oy * W + ox)) % hw
            rolled = pltpu.roll(a, shift, axis=1)
            return rolled * mask_ref[(oy + 2) * 5 + (ox + 2)]     # (1, hw) mask

        def conv_prelu(a, w_ref, b_ref, alpha_ref, k, pad, cout):
            if k == 1:
                acc = jnp.dot(w_ref[...], a, preferred_element_type=jnp.float32)
            else:
                acc = jnp.zeros((cout, hw), jnp.float32)
                for dy in range(k):
                    for dx in range(k):
                        acc = acc + jnp.dot(
                            w_ref[dy * k + dx], shifted(a, dy, dx, pad),
                            preferred_element_type=jnp.float32)
            acc = acc + b_ref[...]                                 # (cout, 1)
            return jnp.where(acc > 0.0, acc, acc * alpha_ref[...])

        h = x_ref[...]                                             # (3, H*W) f32
        h = conv_prelu(h, fe_w, fe_b, fe_a, 5, 2, 56)              # feature_extraction
        h = conv_prelu(h, sh_w, sh_b, sh_a, 1, 0, 12)              # shrink
        h = conv_prelu(h, m0_w, m0_b, m0_a, 3, 1, 12)              # map x4
        h = conv_prelu(h, m1_w, m1_b, m1_a, 3, 1, 12)
        h = conv_prelu(h, m2_w, m2_b, m2_a, 3, 1, 12)
        h = conv_prelu(h, m3_w, m3_b, m3_a, 3, 1, 12)
        h = conv_prelu(h, ex_w, ex_b, ex_a, 1, 0, 56)              # expand

        # Deconv as sub-pixel convolution: all s*s phases as rows of one
        # lane-dense (48, H*W) block.  No activation.
        acc = jnp.zeros((out_rows, hw), jnp.float32)
        for dy in range(3):
            for dx in range(3):
                acc = acc + jnp.dot(de_w[dy * 3 + dx], shifted(h, dy, dx, 1),
                                    preferred_element_type=jnp.float32)
        o_ref[...] = acc + de_b[...]

    return kernel


# --------------------------------------------------------------------------
# Public forward (NCHW in / NCHW out, like PyTorch)
# --------------------------------------------------------------------------
def fsrcnn_forward(x_nchw, p, upscale_factor=4):
    # TODO(synk): sub-pixel deconv decomposition is specialized to the module's
    # default upscale_factor=4 (pad=4, kernel=9); other factors not implemented.
    if upscale_factor != 4:
        raise NotImplementedError("fsrcnn_forward supports upscale_factor=4")
    s = upscale_factor
    n, cin, H, W = x_nchw.shape
    hw = H * W
    if hw % 128 != 0:
        raise NotImplementedError("H*W must be a multiple of 128 (lane dim)")

    x_flat = x_nchw.reshape(n, cin, hw).astype(jnp.float32)

    def c1(v):  # (C,) -> (C, 1) column, broadcast along lanes in-kernel
        return v.reshape(-1, 1).astype(jnp.float32)

    const_args = [_boundary_masks(H, W, max_off=2)]
    const_args += [_conv_tap_weights(p["fe_w"]), c1(p["fe_b"]), c1(p["fe_a"])]
    const_args += [p["sh_w"].reshape(12, 56).astype(jnp.float32),
                   c1(p["sh_b"]), c1(p["sh_a"])]
    for i in range(4):
        const_args += [_conv_tap_weights(p[f"map{i}_w"]),
                       c1(p[f"map{i}_b"]), c1(p[f"map{i}_a"])]
    const_args += [p["ex_w"].reshape(56, 12).astype(jnp.float32),
                   c1(p["ex_b"]), c1(p["ex_a"])]
    const_args += [_deconv_phase_tap_weights(p["de_w"], s),
                   c1(jnp.tile(p["de_b"], s * s))]

    in_specs = [pl.BlockSpec((None, cin, hw), lambda i: (i, 0, 0))]
    for a in const_args:
        in_specs.append(pl.BlockSpec(a.shape, lambda i, _nd=a.ndim: (0,) * _nd))

    out_rows = s * s * 3
    out = pl.pallas_call(
        _make_fsrcnn_kernel(H, W, s),
        out_shape=jax.ShapeDtypeStruct((n, out_rows, hw), jnp.float32),
        grid_spec=pltpu.PrefetchScalarGridSpec(
            num_scalar_prefetch=0,
            grid=(n,),
            in_specs=in_specs,
            out_specs=pl.BlockSpec((None, out_rows, hw), lambda i: (i, 0, 0)),
        ),
        compiler_params=pltpu.CompilerParams(
            dimension_semantics=("parallel",),   # v7x: one image per TensorCore
        ),
    )(x_flat, *const_args)

    # pixel shuffle: rows are (fy, fx, co); columns are (qy, qx)
    out = out.reshape(n, s, s, 3, H, W)
    out = jnp.transpose(out, (0, 3, 4, 1, 5, 2))       # (n, co, qy, fy, qx, fx)
    return out.reshape(n, 3, H * s, W * s)


# --------------------------- FSRCNN parameters ------------------------------
def init_params(key, upscale_factor=4):
    del upscale_factor
    ks = jax.random.split(key, 8)

    def conv_w(k, cout, cin, khw):
        std = sqrt(2.0 / (cout * khw * khw))
        return jax.random.normal(k, (cout, cin, khw, khw), jnp.float32) * std

    p = {}
    p["fe_w"] = conv_w(ks[0], 56, 3, 5)
    p["fe_b"] = jnp.zeros((56,), jnp.float32)
    p["fe_a"] = jnp.full((56,), 0.25, jnp.float32)
    p["sh_w"] = conv_w(ks[1], 12, 56, 1)
    p["sh_b"] = jnp.zeros((12,), jnp.float32)
    p["sh_a"] = jnp.full((12,), 0.25, jnp.float32)
    for i in range(4):
        p[f"map{i}_w"] = conv_w(ks[2 + i], 12, 12, 3)
        p[f"map{i}_b"] = jnp.zeros((12,), jnp.float32)
        p[f"map{i}_a"] = jnp.full((12,), 0.25, jnp.float32)
    p["ex_w"] = conv_w(ks[6], 56, 12, 1)
    p["ex_b"] = jnp.zeros((56,), jnp.float32)
    p["ex_a"] = jnp.full((56,), 0.25, jnp.float32)
    # ConvTranspose2d weight shape in PyTorch: (in=56, out=3, 9, 9), std=0.001
    p["de_w"] = jax.random.normal(ks[7], (56, 3, 9, 9), jnp.float32) * 0.001
    p["de_b"] = jnp.zeros((3,), jnp.float32)
    return p


# ----------------------- pure-JAX reference (check) --------------------------
def _ref_forward(x_nchw, p, upscale_factor=4):
    dn = ("NCHW", "OIHW", "NCHW")
    hp = jax.lax.Precision.HIGHEST

    def conv(x, w, b, pad):
        y = jax.lax.conv_general_dilated(
            x, w, (1, 1), [(pad, pad), (pad, pad)],
            dimension_numbers=dn, precision=hp)
        return y + b[None, :, None, None]

    def prelu(x, a):
        return jnp.where(x > 0, x, x * a[None, :, None, None])

    h = prelu(conv(x_nchw, p["fe_w"], p["fe_b"], 2), p["fe_a"])
    h = prelu(conv(h, p["sh_w"], p["sh_b"], 0), p["sh_a"])
    for i in range(4):
        h = prelu(conv(h, p[f"map{i}_w"], p[f"map{i}_b"], 1), p[f"map{i}_a"])
    h = prelu(conv(h, p["ex_w"], p["ex_b"], 0), p["ex_a"])
    s = upscale_factor
    w_conv = jnp.transpose(p["de_w"][:, :, ::-1, ::-1], (1, 0, 2, 3))
    y = jax.lax.conv_general_dilated(
        h, w_conv, (1, 1), [(4, 4 + s - 1), (4, 4 + s - 1)],
        lhs_dilation=(s, s), dimension_numbers=dn, precision=hp)
    return y + p["de_b"][None, :, None, None]


# --------------------------------- main --------------------------------------
if __name__ == "__main__":
    key = jax.random.PRNGKey(0)
    k_param, k_x = jax.random.split(key)
    params = init_params(k_param, upscale_factor=4)

    x = jax.random.normal(k_x, (2, 3, 16, 16), jnp.float32)  # NCHW like PyTorch

    _roll_sign()  # probe pltpu.roll convention eagerly (cached)

    fwd = jax.jit(fsrcnn_forward)
    y = jax.block_until_ready(fwd(x, params))
    assert y.shape == (2, 3, 64, 64), y.shape

    y_ref = _ref_forward(x, params, upscale_factor=4)
    err = float(jnp.max(jnp.abs(y - y_ref)))
    scale = float(jnp.max(jnp.abs(y_ref))) + 1.0
    assert err < 2e-3 * scale, f"mismatch vs reference: {err}"

    print("KERNEL_OK")
</pallas_src>

<mosaic_0001>
module attributes {stable_mosaic.version = 11 : i64} {
  func.func @probe(%arg0: memref<8x128xf32, #tpu.memory_space<vmem>>, %arg1: memref<8x128xf32, #tpu.memory_space<vmem>>) attributes {dimension_semantics = [], scalar_prefetch = 0 : i64, scratch_operands = 0 : i64, tpu.core_type = #tpu.core_type<tc>} {
    %c0 = arith.constant 0 : index
    %c0_0 = arith.constant 0 : index
    %0 = vector.load %arg0[%c0, %c0_0] : memref<8x128xf32, #tpu.memory_space<vmem>>, vector<8x128xf32>
    %c1_i32 = arith.constant 1 : i32
    %1 = tpu.dynamic_rotate %0 by %c1_i32 dim 1 : vector<8x128xf32>, i32 -> vector<8x128xf32>
    %c0_1 = arith.constant 0 : index
    %c0_2 = arith.constant 0 : index
    %2 = vector.load %arg1[%c0_1, %c0_2] : memref<8x128xf32, #tpu.memory_space<vmem>>, vector<8x128xf32>
    tpu.vector_store %arg1[%c0_1, %c0_2], %1 {strides = array<i32>} : memref<8x128xf32, #tpu.memory_space<vmem>>, vector<8x128xf32>,
    return
  }
}

</mosaic_0001>

<llo_original>
// kernel: tpu_custom_call.1
$region0: #{tpu_custom_call.1}
  #allocation0 [shape = 'u32[]', space=smem, size = 0x4, offset = 0x4, fixed_abs, tag = 'smem constant byte address 0x4 - core index']
  #allocation1 [shape = 'u32[144,128]{1,0:T(1,128)}', space=vmem, size = 0x12000, scoped, tag = 'internal scratch']
  %s0 = inlined_call_operand.hbm [shape: f32[8,128], index: 0, kind: input, shape index: {}]
  %s1 = inlined_call_operand.hbm [shape: f32[8,128], index: 1, kind: output, shape index: {}]
  %s2 = sld [smem:[#allocation0]]
  $region18: #{tpu_custom_call.1} parent=0
    _
  %s4 = ssub.s32 1, %s2
  %s5 = scalar_select 0, %s4, %s2
  $region1: #{tpu_custom_call.1} parent=0
    #allocation2 [shape = 'u8[4096]{0}', space=vmem, size = 0x1000, scoped, tag = 'input window, operand 0, single buffered']
    #allocation3 [shape = 's32[1]{0}', space=sflag, size = 0x4, scoped, tag = 'scoped memory for tpu_custom_call.1']
    #allocation4 [shape = 's32[1]{0}', space=sflag, size = 0x4, scoped, tag = 'scoped memory for tpu_custom_call.1']
    #allocation5 [shape = 'u8[4096]{0}', space=vmem, size = 0x1000, scoped, tag = 'output window, operand 0, single buffered']
    %6 = vsyncpa [#allocation3], 0
    %7 = vsyncpa [#allocation4], 0
    // Predicated region
    $region2: #{tpu_custom_call.1} parent=1 // pred_check
      _
    $region3: #{tpu_custom_call.1} parent=1 // pred_check_branch
      %9 = sbr.rel (0) target = $region5
    $region4: #{tpu_custom_call.1} parent=1 // pred_region
      %s11 = ssub.s32 128, 128
      %12 = vsyncadd [#allocation3], %s11
      %s14 = sshll.u32 [#allocation2], 4
      %s15 = int_to_ptr.vmem [resolvable:$true] %s14
      %17 = dma.hbm_to_vmem [thread:$0]  %s0, 128, %s15, [#allocation3]
    $region5: #{tpu_custom_call.1} parent=1 // pred_fallthru
      _
    // Predicated region
    $region6: #{tpu_custom_call.1} parent=1 // pred_check
      _
    $region7: #{tpu_custom_call.1} parent=1 // pred_check_branch
      %19 = sbr.rel (0) target = $region9
    $region8: #{tpu_custom_call.1} parent=1 // pred_region
      %20 = dma.done [#allocation3], 128
    $region9: #{tpu_custom_call.1} parent=1 // pred_fallthru
      _
    %v21 = vld [vmem:[#allocation2] sm:$0xff]
    %22 = vrot.lane.b32.xlu0 %v21, 1
    %v23 = vpop.permute.xlu0 %22
    %24 = vst [vmem:[#allocation5] sm:$0xff] %v23
    // Predicated region
    $region10: #{tpu_custom_call.1} parent=1 // pred_check
      _
    $region11: #{tpu_custom_call.1} parent=1 // pred_check_branch
      %26 = sbr.rel (0) target = $region13
    $region12: #{tpu_custom_call.1} parent=1 // pred_region
      %s28 = ssub.s32 128, 128
      %29 = vsyncadd [#allocation4], %s28
      %s31 = sshll.u32 [#allocation5], 4
      %s32 = int_to_ptr.vmem [resolvable:$true] %s31
      %34 = dma.vmem_to_hbm [thread:$0]  %s32, 128, %s1, [#allocation4]
    $region13: #{tpu_custom_call.1} parent=1 // pred_fallthru
      _
    // Predicated region
    $region14: #{tpu_custom_call.1} parent=1 // pred_check
      _
    $region15: #{tpu_custom_call.1} parent=1 // pred_check_branch
      %36 = sbr.rel (0) target = $region17
    $region16: #{tpu_custom_call.1} parent=1 // pred_region
      %37 = dma.done [#allocation4], 128
    $region17: #{tpu_custom_call.1} parent=1 // pred_fallthru
      _
    %38 = vsyncpa [#allocation3], 1
    %39 = vsyncpa [#allocation4], 1

</llo_original>
